<compile_context>
chip_gen: v7x
topology: tpu7x:2x2x1
jax: 0.10.0
libtpu: 0.0.40
codegen_flags: <defaults>
</compile_context>

<pallas_src>
import math

import jax
import jax.numpy as jnp
from jax import lax
from jax.experimental import pallas as pl
from jax.experimental.pallas import tpu as pltpu


def _round_up(n, m):
    return -(-n // m) * m


def _vmem_capacity_bytes():
    """Best-effort physical VMEM per TensorCore; conservative fallback (v7x)."""
    get_info = getattr(pltpu, "get_tpu_info", None)
    if get_info is not None:
        try:
            cap = getattr(get_info(), "vmem_capacity_bytes", None)
            if cap:
                return int(cap)
        except Exception:
            pass
    return 64 * 2**20


def _pick_batch_block(b, c, pack_c_threshold=128):
    """Pack several batch elements per grid step when C under-fills the MXU."""
    if c > pack_c_threshold:
        return 1
    target = min(b, max(1, 512 // max(c, 8)))
    for bt in range(target, 0, -1):
        if b % bt == 0:
            return bt
    return 1


def _pick_hw_block(hw, batch_block, c, itemsize, vmem_cap):
    """Largest 128-multiple HW tile that fits the per-generation VMEM budget."""
    hw128 = _round_up(hw, 128)
    # v7x (64 MiB physical) keeps the conservative 2048 cap; 128 MiB parts
    # (v5e/v6e) are allowed much larger contractions per step.
    t_cap = 2048 if vmem_cap <= 64 * 2**20 else 8192
    c_pad = _round_up(max(c, 8), 8)
    scratch = batch_block * c_pad * max(_round_up(c, 128), 128) * 4
    budget = int(0.45 * vmem_cap) - scratch
    per_col = 4 * batch_block * c_pad * itemsize      # 2x in + 2x out buffers
    t_budget = max(128, budget // max(per_col, 1))
    t = max(128, min(t_cap, t_budget, hw128))
    t -= t % 128
    while hw128 % t:                                  # minimize padding
        t -= 128
    return t


def _make_cam_kernel(energy_mode, apply_dtype, approx_recip):
    def kernel(gamma_ref, x_ref, o_ref, eattn_ref):
        # grid = (batch_blocks, sweep in {0: energy, 1: apply}, hw_tiles)
        s = pl.program_id(1)
        k = pl.program_id(2)
        nk = pl.num_programs(2)

        xt = x_ref[...]  # (Bt, C, T), input dtype

        @pl.when(jnp.logical_and(s == 0, k == 0))
        def _init():
            eattn_ref[...] = jnp.zeros_like(eattn_ref)

        @pl.when(s == 0)
        def _accumulate_energy():
            def bdot(a, b):
                # einsum('bct,bdt->bcd'): contract the HW-tile axis, no transpose.
                return lax.dot_general(
                    a, b,
                    dimension_numbers=(((2,), (2,)), ((0,), (0,))),
                    preferred_element_type=jnp.float32,
                )

            if energy_mode == "bf16x3":
                # Explicit hi/lo split: near-f32 energy with 3 bf16 MXU passes.
                xf = xt.astype(jnp.float32)
                xh = xf.astype(jnp.bfloat16)
                xl = (xf - xh.astype(jnp.float32)).astype(jnp.bfloat16)
                eattn_ref[...] += bdot(xh, xh) + bdot(xh, xl) + bdot(xl, xh)
            elif energy_mode == "bf16":
                xb = xt.astype(jnp.bfloat16)
                eattn_ref[...] += bdot(xb, xb)
            else:  # "f32" (multi-pass MXU emulation, most accurate)
                xf = xt.astype(jnp.float32)
                eattn_ref[...] += bdot(xf, xf)

        @pl.when(jnp.logical_and(s == 0, k == nk - 1))
        def _softmax_in_place():
            e = eattn_ref[...]
            # softmax(rowmax - e) == softmax(rowmin - e) by shift invariance;
            # the min-shift is already <= 0 so exp cannot overflow.
            shifted = jnp.min(e, axis=-1, keepdims=True) - e
            ex = jnp.exp(shifted)
            denom = jnp.sum(ex, axis=-1, keepdims=True)
            eattn_ref[...] = ex * pl.reciprocal(denom, approx=approx_recip)

        @pl.when(s == 1)
        def _apply_attention():
            # Attention entries are in [0,1] / rows sum to 1 -> bf16 operands with
            # f32 accumulation are numerically benign here (default apply_dtype).
            attn = eattn_ref[...].astype(apply_dtype)
            out = lax.dot_general(
                attn, xt.astype(apply_dtype),
                dimension_numbers=(((2,), (1,)), ((0,), (0,))),
                preferred_element_type=jnp.float32,
            )
            gamma = gamma_ref[0]
            o_ref[...] = (gamma * out + xt.astype(jnp.float32)).astype(o_ref.dtype)

    return kernel


def cam_module_forward(x, gamma, *, hw_block=None, batch_block=None,
                       energy_precision=None, apply_dtype=None,
                       approx_recip=True):
    """CAM_Module forward.  x: (B, C, H, W); gamma: shape-(1,) parameter."""
    B, C, H, W = x.shape
    HW = H * W
    x_dtype = x.dtype
    itemsize = jnp.dtype(x_dtype).itemsize

    if energy_precision is None:
        energy_precision = "bf16" if x_dtype == jnp.bfloat16 else "bf16x3"
    assert energy_precision in ("f32", "bf16x3", "bf16"), energy_precision
    apply_dtype = jnp.dtype(apply_dtype) if apply_dtype is not None else jnp.bfloat16

    vmem_cap = _vmem_capacity_bytes()

    if batch_block is None:
        batch_block = _pick_batch_block(B, C)
    assert B % batch_block == 0, (B, batch_block)

    if hw_block is None:
        hw_block = _pick_hw_block(HW, batch_block, C, itemsize, vmem_cap)
    HW_pad = _round_up(HW, hw_block)
    assert hw_block % 128 == 0 or HW_pad == HW == hw_block, (hw_block, HW)

    K = HW_pad // hw_block
    GB = B // batch_block

    # VMEM accounting: double-buffered in + out tiles plus the (Bt, C, C) scratch
    # (sublane/lane padded).  Request modest headroom; never the full physical VMEM.
    c_pad = _round_up(max(C, 8), 8)
    blk_bytes = batch_block * c_pad * hw_block * itemsize
    scratch_bytes = batch_block * c_pad * max(_round_up(C, 128), 128) * 4
    assert scratch_bytes < 0.4 * vmem_cap, (
        "attention scratch too large for VMEM; shrink batch_block / C")
    needed = 4 * blk_bytes + scratch_bytes
    vmem_limit = int(min(0.8 * vmem_cap, max(32 * 2**20, 1.5 * needed)))
    vmem_limit = max(vmem_limit, int(1.2 * needed))

    x_flat = x.reshape(B, C, HW)
    if HW_pad != HW:
        # Zero columns: energy (x @ x^T) is unchanged; padded output columns are 0
        # (attention @ 0 and residual 0) and sliced off below.
        x_flat = jnp.pad(x_flat, ((0, 0), (0, 0), (0, HW_pad - HW)))

    block = (batch_block, C, hw_block)

    out_flat = pl.pallas_call(
        _make_cam_kernel(energy_precision, apply_dtype, approx_recip),
        out_shape=jax.ShapeDtypeStruct((B, C, HW_pad), x_dtype),
        grid_spec=pltpu.PrefetchScalarGridSpec(
            num_scalar_prefetch=0,
            grid=(GB, 2, K),
            in_specs=[
                pl.BlockSpec(memory_space=pltpu.MemorySpace.SMEM),  # gamma (1,)
                pl.BlockSpec(block, lambda b, s, k: (b, 0, k)),     # x tile
            ],
            # INVARIANT (do not change independently): during sweep 0 the output
            # residency is parked on block (b, 0, 0) and never written (so no
            # garbage writeback); sweep 1 writes block (b, 0, k) starting with
            # k == 0, i.e. exactly the parked block, before its first flush.
            out_specs=pl.BlockSpec(block, lambda b, s, k: (b, 0, s * k)),
            scratch_shapes=[pltpu.VMEM((batch_block, C, C), jnp.float32)],
        ),
        compiler_params=pltpu.CompilerParams(
            dimension_semantics=("parallel", "arbitrary", "arbitrary"),
            vmem_limit_bytes=vmem_limit,
        ),
        cost_estimate=pl.CostEstimate(
            flops=4 * B * C * C * HW_pad,        # two C x HW x C matmuls per batch
            transcendentals=B * C * C,            # softmax exp
            bytes_accessed=3 * B * C * HW_pad * itemsize,
        ),
    )(gamma, x_flat)

    if HW_pad != HW:
        out_flat = out_flat[:, :, :HW]
    return out_flat.reshape(B, C, H, W)


def cam_module_reference(x, gamma):
    """Pure-JAX reference (HIGHEST precision so the f32 reference is exact-ish)."""
    B, C, H, W = x.shape
    q = x.reshape(B, C, H * W).astype(jnp.float32)
    energy = jnp.einsum("bcn,bdn->bcd", q, q, precision=lax.Precision.HIGHEST)
    energy_new = jnp.max(energy, axis=-1, keepdims=True) - energy
    attention = jax.nn.softmax(energy_new, axis=-1)
    out = jnp.einsum("bcd,bdn->bcn", attention, q,
                     precision=lax.Precision.HIGHEST).reshape(B, C, H, W)
    return gamma[0] * out + x.astype(jnp.float32)


if __name__ == "__main__":
    key = jax.random.PRNGKey(0)
    B, C, H, W = 2, 4, 16, 16
    x = jax.random.normal(key, (B, C, H, W), dtype=jnp.float32)

    # 1) Module init: gamma = zeros(1) -> output must equal x exactly.
    gamma0 = jnp.zeros((1,), dtype=jnp.float32)
    out0 = jax.block_until_ready(cam_module_forward(x, gamma0))
    assert out0.shape == (B, C, H, W)
    assert jnp.allclose(out0, x, atol=1e-6, rtol=1e-6)

    gamma = jnp.full((1,), 0.5, dtype=jnp.float32)
    ref = cam_module_reference(x, gamma)

    # 2) Strict-accuracy configuration (f32 energy + f32 apply + exact reciprocal),
    #    multi-tile HW accumulation: tight tolerance catches axis/accumulation bugs.
    out_strict = jax.block_until_ready(
        cam_module_forward(x, gamma, hw_block=128, batch_block=2,
                           energy_precision="f32", apply_dtype=jnp.float32,
                           approx_recip=False))
    err_strict = float(jnp.max(jnp.abs(out_strict - ref)))
    assert err_strict < 2e-3, err_strict

    # 3) Default performance configuration (bf16x3 energy, bf16 apply, approx recip).
    out_fast = jax.block_until_ready(
        cam_module_forward(x, gamma, hw_block=128, batch_block=2))
    err_fast = float(jnp.max(jnp.abs(out_fast - ref)))
    assert err_fast < 3e-2, err_fast

    # 4) Fully automatic tiling heuristics (single HW tile path here).
    out_auto = jax.block_until_ready(cam_module_forward(x, gamma))
    err_auto = float(jnp.max(jnp.abs(out_auto - ref)))
    assert err_auto < 3e-2, err_auto

    # 5) Odd spatial size -> HW zero-padding path (100 -> 128 lanes).
    x_odd = jax.random.normal(jax.random.PRNGKey(1), (2, 4, 10, 10), jnp.float32)
    ref_odd = cam_module_reference(x_odd, gamma)
    out_odd = jax.block_until_ready(cam_module_forward(x_odd, gamma))
    err_odd = float(jnp.max(jnp.abs(out_odd - ref_odd)))
    assert err_odd < 3e-2, err_odd

    # 6) Opt-in single-pass bf16 energy: compile/run sanity only (CAM logits scale
    #    with HW, so plain bf16 energy is intentionally not held to tight tolerance).
    out_bf16 = jax.block_until_ready(
        cam_module_forward(x, gamma, energy_precision="bf16"))
    assert out_bf16.shape == (B, C, H, W)
    assert bool(jnp.all(jnp.isfinite(out_bf16)))

    print("KERNEL_OK")
</pallas_src>

<mosaic_0001>
module attributes {stable_mosaic.version = 11 : i64} {
  func.func @kernel(%arg0: i32, %arg1: i32, %arg2: i32, %arg3: memref<1xf32, #tpu.memory_space<smem>>, %arg4: memref<2x4x256xf32, #tpu.memory_space<vmem>>, %arg5: memref<2x4x256xf32, #tpu.memory_space<vmem>>, %arg6: memref<2x4x4xf32, #tpu.memory_space<vmem>>) attributes {dimension_semantics = [#tpu.dimension_semantics<parallel>, #tpu.dimension_semantics<arbitrary>, #tpu.dimension_semantics<arbitrary>], iteration_bounds = array<i64: 1, 2, 1>, scalar_prefetch = 0 : i64, scratch_operands = 1 : i64, tpu.core_type = #tpu.core_type<tc>, window_params = [{transform_indices = @transform_0, window_bounds = array<i64: 1>}, {transform_indices = @transform_1, window_bounds = array<i64: 2, 4, 256>}, {transform_indices = @transform_2, window_bounds = array<i64: 2, 4, 256>}]} {
    %c0 = arith.constant 0 : index
    %c0_0 = arith.constant 0 : index
    %c0_1 = arith.constant 0 : index
    %0 = vector.load %arg4[%c0, %c0_0, %c0_1] : memref<2x4x256xf32, #tpu.memory_space<vmem>>, vector<2x4x256xf32>
    %c0_i32 = arith.constant 0 : i32
    %1 = arith.cmpi eq, %arg1, %c0_i32 : i32
    %c0_i32_2 = arith.constant 0 : i32
    %2 = arith.cmpi eq, %arg2, %c0_i32_2 : i32
    %3 = arith.andi %1, %2 : i1
    %4 = arith.extui %3 : i1 to i32
    %c0_i32_3 = arith.constant 0 : i32
    %5 = arith.cmpi ne, %4, %c0_i32_3 : i32
    scf.if %5 {
      %cst = arith.constant 0.000000e+00 : f32
      %17 = vector.broadcast %cst : f32 to vector<2x4x4xf32>
      %c0_10 = arith.constant 0 : index
      %c0_11 = arith.constant 0 : index
      %c0_12 = arith.constant 0 : index
      %18 = vector.load %arg6[%c0_10, %c0_11, %c0_12] : memref<2x4x4xf32, #tpu.memory_space<vmem>>, vector<2x4x4xf32>
      tpu.vector_store %arg6[%c0_10, %c0_11, %c0_12], %17 {strides = array<i32>} : memref<2x4x4xf32, #tpu.memory_space<vmem>>, vector<2x4x4xf32>,
    } else {
    }
    %c0_i32_4 = arith.constant 0 : i32
    %6 = arith.cmpi eq, %arg1, %c0_i32_4 : i32
    %7 = arith.extui %6 : i1 to i32
    %c0_i32_5 = arith.constant 0 : i32
    %8 = arith.cmpi ne, %7, %c0_i32_5 : i32
    scf.if %8 {
      %17 = arith.truncf %0 : vector<2x4x256xf32> to vector<2x4x256xbf16>
      %18 = arith.extf %17 : vector<2x4x256xbf16> to vector<2x4x256xf32>
      %19 = arith.subf %0, %18 : vector<2x4x256xf32>
      %20 = arith.truncf %19 : vector<2x4x256xf32> to vector<2x4x256xbf16>
      %c0_10 = arith.constant 0 : index
      %c0_11 = arith.constant 0 : index
      %c0_12 = arith.constant 0 : index
      %21 = vector.load %arg6[%c0_10, %c0_11, %c0_12] : memref<2x4x4xf32, #tpu.memory_space<vmem>>, vector<2x4x4xf32>
      %cst = arith.constant dense<0.000000e+00> : vector<2x4x4xf32>
      %22 = tpu.matmul %17, %17, %cst {dimension_numbers = #tpu.dot_dimension_numbers<[2], [2], [1], [1], [0, 0, 0, 1, 1, 1], [0], [0]>} : vector<2x4x256xbf16>, vector<2x4x256xbf16>, vector<2x4x4xf32> -> vector<2x4x4xf32>
      %cst_13 = arith.constant dense<0.000000e+00> : vector<2x4x4xf32>
      %23 = tpu.matmul %17, %20, %cst_13 {dimension_numbers = #tpu.dot_dimension_numbers<[2], [2], [1], [1], [0, 0, 0, 1, 1, 1], [0], [0]>} : vector<2x4x256xbf16>, vector<2x4x256xbf16>, vector<2x4x4xf32> -> vector<2x4x4xf32>
      %24 = arith.addf %22, %23 : vector<2x4x4xf32>
      %cst_14 = arith.constant dense<0.000000e+00> : vector<2x4x4xf32>
      %25 = tpu.matmul %20, %17, %cst_14 {dimension_numbers = #tpu.dot_dimension_numbers<[2], [2], [1], [1], [0, 0, 0, 1, 1, 1], [0], [0]>} : vector<2x4x256xbf16>, vector<2x4x256xbf16>, vector<2x4x4xf32> -> vector<2x4x4xf32>
      %26 = arith.addf %24, %25 : vector<2x4x4xf32>
      %27 = arith.addf %21, %26 : vector<2x4x4xf32>
      %c0_15 = arith.constant 0 : index
      %c0_16 = arith.constant 0 : index
      %c0_17 = arith.constant 0 : index
      %28 = vector.load %arg6[%c0_15, %c0_16, %c0_17] : memref<2x4x4xf32, #tpu.memory_space<vmem>>, vector<2x4x4xf32>
      tpu.vector_store %arg6[%c0_15, %c0_16, %c0_17], %27 {strides = array<i32>} : memref<2x4x4xf32, #tpu.memory_space<vmem>>, vector<2x4x4xf32>,
    } else {
    }
    %c0_i32_6 = arith.constant 0 : i32
    %9 = arith.cmpi eq, %arg1, %c0_i32_6 : i32
    %c0_i32_7 = arith.constant 0 : i32
    %10 = arith.cmpi eq, %arg2, %c0_i32_7 : i32
    %11 = arith.andi %9, %10 : i1
    %12 = arith.extui %11 : i1 to i32
    %c0_i32_8 = arith.constant 0 : i32
    %13 = arith.cmpi ne, %12, %c0_i32_8 : i32
    scf.if %13 {
      %c0_10 = arith.constant 0 : index
      %c0_11 = arith.constant 0 : index
      %c0_12 = arith.constant 0 : index
      %17 = vector.load %arg6[%c0_10, %c0_11, %c0_12] : memref<2x4x4xf32, #tpu.memory_space<vmem>>, vector<2x4x4xf32>
      %cst = arith.constant dense<0x7F800000> : vector<2x4xf32>
      %18 = vector.multi_reduction <minimumf>, %17, %cst [2] : vector<2x4x4xf32> to vector<2x4xf32>
      %19 = vector.shape_cast %18 : vector<2x4xf32> to vector<2x4x1xf32>
      %20 = vector.broadcast %19 : vector<2x4x1xf32> to vector<2x4x4xf32>
      %21 = arith.subf %20, %17 : vector<2x4x4xf32>
      %22 = math.exp %21 : vector<2x4x4xf32>
      %cst_13 = arith.constant dense<0.000000e+00> : vector<2x4xf32>
      %23 = vector.multi_reduction <add>, %22, %cst_13 [2] : vector<2x4x4xf32> to vector<2x4xf32>
      %24 = vector.shape_cast %23 : vector<2x4xf32> to vector<2x4x1xf32>
      %25 = tpu.reciprocal %24 {approx = true} : vector<2x4x1xf32> -> vector<2x4x1xf32>
      %26 = vector.broadcast %25 : vector<2x4x1xf32> to vector<2x4x4xf32>
      %27 = arith.mulf %22, %26 : vector<2x4x4xf32>
      %c0_14 = arith.constant 0 : index
      %c0_15 = arith.constant 0 : index
      %c0_16 = arith.constant 0 : index
      %28 = vector.load %arg6[%c0_14, %c0_15, %c0_16] : memref<2x4x4xf32, #tpu.memory_space<vmem>>, vector<2x4x4xf32>
      tpu.vector_store %arg6[%c0_14, %c0_15, %c0_16], %27 {strides = array<i32>} : memref<2x4x4xf32, #tpu.memory_space<vmem>>, vector<2x4x4xf32>,
    } else {
    }
    %c1_i32 = arith.constant 1 : i32
    %14 = arith.cmpi eq, %arg1, %c1_i32 : i32
    %15 = arith.extui %14 : i1 to i32
    %c0_i32_9 = arith.constant 0 : i32
    %16 = arith.cmpi ne, %15, %c0_i32_9 : i32
    scf.if %16 {
      %c0_10 = arith.constant 0 : index
      %c0_11 = arith.constant 0 : index
      %c0_12 = arith.constant 0 : index
      %17 = vector.load %arg6[%c0_10, %c0_11, %c0_12] : memref<2x4x4xf32, #tpu.memory_space<vmem>>, vector<2x4x4xf32>
      %18 = arith.truncf %17 : vector<2x4x4xf32> to vector<2x4x4xbf16>
      %19 = arith.truncf %0 : vector<2x4x256xf32> to vector<2x4x256xbf16>
      %cst = arith.constant dense<0.000000e+00> : vector<2x4x256xf32>
      %20 = tpu.matmul %18, %19, %cst {dimension_numbers = #tpu.dot_dimension_numbers<[2], [1], [1], [2], [0, 0, 0, 1, 1, 2], [0], [0]>} : vector<2x4x4xbf16>, vector<2x4x256xbf16>, vector<2x4x256xf32> -> vector<2x4x256xf32>
      %c0_13 = arith.constant 0 : index
      %21 = memref.load %arg3[%c0_13] : memref<1xf32, #tpu.memory_space<smem>>
      %22 = vector.broadcast %21 : f32 to vector<2x4x256xf32>
      %23 = arith.mulf %22, %20 : vector<2x4x256xf32>
      %24 = arith.addf %23, %0 : vector<2x4x256xf32>
      %c0_14 = arith.constant 0 : index
      %c0_15 = arith.constant 0 : index
      %c0_16 = arith.constant 0 : index
      %25 = vector.load %arg5[%c0_14, %c0_15, %c0_16] : memref<2x4x256xf32, #tpu.memory_space<vmem>>, vector<2x4x256xf32>
      tpu.vector_store %arg5[%c0_14, %c0_15, %c0_16], %24 {strides = array<i32>} : memref<2x4x256xf32, #tpu.memory_space<vmem>>, vector<2x4x256xf32>,
    } else {
    }
    return
  }
  func.func @transform_0(%arg0: i32, %arg1: i32, %arg2: i32) -> i32 {
    %c0_i32 = arith.constant 0 : i32
    %c0_i32_0 = arith.constant 0 : i32
    return %c0_i32 : i32
  }
  func.func @transform_1(%arg0: i32, %arg1: i32, %arg2: i32) -> (i32, i32, i32) {
    %c0_i32 = arith.constant 0 : i32
    %c0_i32_0 = arith.constant 0 : i32
    return %arg0, %c0_i32, %arg2 : i32, i32, i32
  }
  func.func @transform_2(%arg0: i32, %arg1: i32, %arg2: i32) -> (i32, i32, i32) {
    %0 = arith.muli %arg1, %arg2 : i32
    %c0_i32 = arith.constant 0 : i32
    %c0_i32_0 = arith.constant 0 : i32
    return %arg0, %c0_i32, %0 : i32, i32, i32
  }
}

</mosaic_0001>

<llo_original>
// kernel: tpu_custom_call.1
$region0: #{tpu_custom_call.1}
  #allocation0 [shape = 'u32[]', space=smem, size = 0x4, offset = 0x4, fixed_abs, tag = 'smem constant byte address 0x4 - core index']
  #allocation1 [shape = 'u32[144,128]{1,0:T(1,128)}', space=vmem, size = 0x12000, scoped, tag = 'internal scratch']
  #allocation2 [shape = 'f32[2,4,4]{2,1,0:T(4,128)}', space=vmem, size = 0x1000, scoped, tag = 'scratch operand']
  #allocation3 [shape = 'f32[1]{0:T(128)S(6)}', space=smem, size = 0x200, scoped, tag = 'scoped memory for tpu_custom_call.1']
  %s0 = inlined_call_operand.<no memory space> [shape: f32[1], index: 0, kind: input, shape index: {}]
  %s1 = inlined_call_operand.hbm [shape: f32[2,4,256], index: 1, kind: input, shape index: {}]
  %s2 = inlined_call_operand.hbm [shape: f32[2,4,256], index: 2, kind: output, shape index: {}]
  %s3 = sld [smem:[#allocation0]]
  $region61: #{tpu_custom_call.1} parent=0
    _
  %s5 = ssub.s32 1, %s3
  %s6 = scalar_select 0, %s5, %s3
  %7 = sst [smem:[#allocation3]] %s0
  $region1: #{tpu_custom_call.1} parent=0
    #allocation4 [shape = 'u8[8192]{0}', space=vmem, size = 0x2000, scoped, tag = 'input window, operand 1, single buffered']
    #allocation5 [shape = 's32[2]{0}', space=sflag, size = 0x8, scoped, tag = 'scoped memory for tpu_custom_call.1']
    #allocation6 [shape = 's32[2]{0}', space=sflag, size = 0x8, scoped, tag = 'scoped memory for tpu_custom_call.1']
    #allocation7 [shape = 'u8[16384]{0}', space=vmem, size = 0x4000, scoped, tag = 'output window, operand 0']
    %8 = vsyncpa [#allocation5], 0
    %9 = vsyncpa [#allocation6], 0
    %s10 = scalar_lea.sflag [#allocation6], 1
    %11 = vsyncpa %s10, 0
    loop: start=0, step=1, limit=4
    $region2: #{tpu_custom_call.1} parent=1 // loop_pre_header
      _
    $region3: #{tpu_custom_call.1} parent=1 // loop_header
      %s13 = sphi 0, %s17
      %p14 = scmp.ge.s32.totalorder %s13, 4
      %s20 = sphi 0, %s39
      %s21 = sphi 0, %s35
      %s22 = sphi 0, %s31
      %s23 = sphi 0, %s20
      %s24 = sphi 0, %s21
      %s25 = sphi 0, %s22
      %s26 = sphi 0, %s23
      %s27 = sphi 0, %s24
      %s28 = sphi 0, %s25
      %s40 = sphi 0, %s40
      %s42 = sphi 0, %s40
      %s43 = sphi 0, %s42
      %s57 = sphi 0, %s43
      %s65 = sphi 0, %s67
      %s68 = sphi 0, %s65
      %s69 = sphi 0, %s68
      %s85 = sphi 0, %s69
      %s95 = sphi 0, %s97
      %s98 = sphi 0, %s95
      %s99 = sphi 0, %s98
      %s115 = sphi 0, %s99
    $region4: #{tpu_custom_call.1} parent=1 // loop_header_branch
      %16 = sbr.rel (%p14) target = $region8
    $region5: #{tpu_custom_call.1} parent=1 // loop_body
      %s18 = ssub.s32 %s13, 1
      %s19 = ssub.s32 %s13, 2
      %s29 = sadd.s32 1, %s22
      %p30 = scmp.ge.s32.totalorder %s29, 1
      %s31 = scalar_select %p30, 0, %s29
      %s32 = sadd.s32 1, %s21
      %s33 = scalar_select %p30, %s32, %s21
      %p34 = scmp.ge.s32.totalorder %s33, 2
      %s35 = scalar_select %p34, 0, %s33
      %s36 = sadd.s32 1, %s20
      %s37 = scalar_select %p34, %s36, %s20
      %p38 = scmp.ge.s32.totalorder %s37, 1
      %s39 = scalar_select %p38, 0, %s37
      %s41 = sadd.s32 %s40, 1
      %p44 = scmp.eq.s32.totalorder %s13, 1
      %p45 = scmp.ne.s32.totalorder %s40, %s42
      %p46 = scmp.eq.s32.totalorder %s13, 0
      %p47 = por %p45, %p46
      %p48 = scmp.ne.s32.totalorder %s40, %s42
      %p49 = scmp.eq.s32.totalorder %s18, 1
      %p50 = por %p48, %p49
      %p51 = scmp.ne.s32.totalorder %s42, %s43
      %p52 = scmp.eq.s32.totalorder %s18, 0
      %p53 = por %p51, %p52
      %p54 = scmp.ne.s32.totalorder %s42, %s43
      %p55 = scmp.eq.s32.totalorder %s19, 1
      %p56 = por %p54, %p55
      %p58 = scmp.ne.s32.totalorder %s43, %s57
      %p59 = scmp.eq.s32.totalorder %s19, 0
      %p60 = por %p58, %p59
      %s61 = ssub.s32 %s20, %s39
      %s62 = ssub.s32 %s22, %s31
      %s63 = sor.u32 %s61, %s62
      %p64 = scmp.eq.s32.totalorder %s63, 0
      %s66 = sadd.s32 %s65, 1
      %s67 = scalar_select %p64, %s65, %s66
      %p70 = pneg %p64
      %p71 = scmp.eq.s32.totalorder %s13, 1
      %p72 = por %p70, %p71
      %p73 = scmp.ne.s32.totalorder %s65, %s68
      %p74 = scmp.eq.s32.totalorder %s13, 0
      %p75 = por %p73, %p74
      %p76 = scmp.ne.s32.totalorder %s65, %s68
      %p77 = scmp.eq.s32.totalorder %s18, 1
      %p78 = por %p76, %p77
      %p79 = scmp.ne.s32.totalorder %s68, %s69
      %p80 = scmp.eq.s32.totalorder %s18, 0
      %p81 = por %p79, %p80
      %p82 = scmp.ne.s32.totalorder %s68, %s69
      %p83 = scmp.eq.s32.totalorder %s19, 1
      %p84 = por %p82, %p83
      %p86 = scmp.ne.s32.totalorder %s69, %s85
      %p87 = scmp.eq.s32.totalorder %s19, 0
      %p88 = por %p86, %p87
      %s89 = smul.u32 %s21, %s22
      %s90 = smul.u32 %s35, %s31
      %s91 = ssub.s32 %s20, %s39
      %s92 = ssub.s32 %s89, %s90
      %s93 = sor.u32 %s91, %s92
      %p94 = scmp.eq.s32.totalorder %s93, 0
      %s96 = sadd.s32 %s95, 1
      %s97 = scalar_select %p94, %s95, %s96
      %p100 = pneg %p94
      %p101 = scmp.eq.s32.totalorder %s13, 1
      %p102 = por %p100, %p101
      %p103 = scmp.ne.s32.totalorder %s95, %s98
      %p104 = scmp.eq.s32.totalorder %s13, 0
      %p105 = por %p103, %p104
      %p106 = scmp.ne.s32.totalorder %s95, %s98
      %p107 = scmp.eq.s32.totalorder %s18, 1
      %p108 = por %p106, %p107
      %p109 = scmp.ne.s32.totalorder %s98, %s99
      %p110 = scmp.eq.s32.totalorder %s18, 0
      %p111 = por %p109, %p110
      %p112 = scmp.ne.s32.totalorder %s98, %s99
      %p113 = scmp.eq.s32.totalorder %s19, 1
      %p114 = por %p112, %p113
      %p116 = scmp.ne.s32.totalorder %s99, %s115
      %p117 = scmp.eq.s32.totalorder %s19, 0
      %p118 = por %p116, %p117
      %p119 = scmp.le.s32.totalorder 1, %s13
      %p120 = scmp.lt.s32.totalorder %s13, 3
      %p121 = pnand %p119, %p120
      %p122 = pneg %p121
      // Predicated region
      $region9: #{tpu_custom_call.1} parent=5 // pred_check
        _
      $region10: #{tpu_custom_call.1} parent=5 // pred_check_branch
        %124 = sbr.rel (%p121) target = $region12
      $region11: #{tpu_custom_call.1} parent=5 // pred_region
        %s125 = ssub.s32 %s13, 1
        // Predicated region
        $region13: #{tpu_custom_call.1} parent=11 // pred_check
          %p126 = pneg %p53
        $region14: #{tpu_custom_call.1} parent=11 // pred_check_branch
          %128 = sbr.rel (%p126) target = $region16
        $region15: #{tpu_custom_call.1} parent=11 // pred_region
          _
        $region16: #{tpu_custom_call.1} parent=11 // pred_fallthru
          _
        // Predicated region
        $region17: #{tpu_custom_call.1} parent=11 // pred_check
          %p129 = pneg %p81
        $region18: #{tpu_custom_call.1} parent=11 // pred_check_branch
          %131 = sbr.rel (%p129) target = $region20
        $region19: #{tpu_custom_call.1} parent=11 // pred_region
          %s132 = smul.u32 2, %s23
          %s133 = smul.u32 2, %s25
          %s135 = ssub.s32 256, 256
          %136 = vsyncadd [#allocation5], %s135
          %s137 = smul.addr %s132, 2
          %s138 = sadd.s32 %s133, %s137
          %s139 = smul.addr %s138, 64
          %s140 = scalar_lea.hbm %s1, %s139
          %s141 = sshll.u32 [#allocation4], 4
          %s142 = int_to_ptr.vmem [resolvable:$true] %s141
          %147 = dma.hbm_to_vmem [thread:$0]  %s140, 256, %s142, [#allocation5], 128, 128, 8
        $region20: #{tpu_custom_call.1} parent=11 // pred_fallthru
          _
      $region12: #{tpu_custom_call.1} parent=5 // pred_fallthru
        _
      %p148 = scmp.lt.s32.totalorder %s13, 2
      // Predicated region
      $region21: #{tpu_custom_call.1} parent=5 // pred_check
        %p149 = pneg %p148
      $region22: #{tpu_custom_call.1} parent=5 // pred_check_branch
        %151 = sbr.rel (%p149) target = $region24
      $region23: #{tpu_custom_call.1} parent=5 // pred_region
        _
      $region24: #{tpu_custom_call.1} parent=5 // pred_fallthru
        _
      %p152 = scmp.le.s32.totalorder 1, %s13
      %p153 = scmp.lt.s32.totalorder %s13, 3
      %p154 = pnand %p152, %p153
      %p155 = pneg %p154
      // Predicated region
      $region25: #{tpu_custom_call.1} parent=5 // pred_check
        _
      $region26: #{tpu_custom_call.1} parent=5 // pred_check_branch
        %157 = sbr.rel (%p154) target = $region28
      $region27: #{tpu_custom_call.1} parent=5 // pred_region
        %s158 = ssub.s32 %s13, 1
        // Predicated region
        $region29: #{tpu_custom_call.1} parent=27 // pred_check
          %p159 = pneg %p81
        $region30: #{tpu_custom_call.1} parent=27 // pred_check_branch
          %161 = sbr.rel (%p159) target = $region32
        $region31: #{tpu_custom_call.1} parent=27 // pred_region
          %162 = dma.done [#allocation5], 256
        $region32: #{tpu_custom_call.1} parent=27 // pred_fallthru
          _
        %p163 = pneg %p53
        %p164 = pneg %p50
        %p165 = pneg %p81
        %p166 = pneg %p78
        %p167 = pneg %p111
        %p168 = pneg %p108
        %s169 = sand.u32 %s98, 1
        %s170 = scalar_lea.sflag [#allocation6], %s169
        %s171 = sand.u32 %s98, 1
        %s172 = smul.addr %s171, 16
        %s173 = scalar_lea.vmem [#allocation7], %s172
        %s174 = smul.u32 2, %s23
        %s175 = smul.u32 2, %s25
        %s176 = smul.u32 %s24, %s25
        %s177 = smul.u32 2, %s23
        %s178 = smul.u32 2, %s176
        %v180 = vld [vmem:[#allocation4] sm:$0xff]
        %v181 = vld [vmem:[#allocation4 + $0x8] sm:$0xff]
        %p182 = scmp.eq.s32.totalorder %s24, 0
        %p183 = scmp.eq.s32.totalorder %s25, 0
        %p184 = pnand %p182, %p183
        %p185 = pneg %p184
        // Predicated region
        $region33: #{tpu_custom_call.1} parent=27 // pred_check
          _
        $region34: #{tpu_custom_call.1} parent=27 // pred_check_branch
          %187 = sbr.rel (%p184) target = $region36
        $region35: #{tpu_custom_call.1} parent=27 // pred_region
          %vm188 = vcmask 27648
          %189 = vst.msk [vmem:[#allocation2] sm:$0xf] %vm188, 0.0
          %190 = vst.msk [vmem:[#allocation2 + $0x4] sm:$0xf] %vm188, 0.0
        $region36: #{tpu_custom_call.1} parent=27 // pred_fallthru
          _
        // Predicated region
        $region37: #{tpu_custom_call.1} parent=27 // pred_check
          %p191 = pneg %p182
        $region38: #{tpu_custom_call.1} parent=27 // pred_check_branch
          %193 = sbr.rel (%p191) target = $region40
        $region39: #{tpu_custom_call.1} parent=27 // pred_region
          %v196 = vcombine.high %v180, %v180
          %v197 = vcombine.high %v181, %v181
          %v200 = vpack.c.bf16 %v180, %v180
          %v201 = vpack.c.bf16 %v196, %v196
          %v202 = vpack.c.bf16 %v181, %v181
          %v203 = vpack.c.bf16 %v197, %v197
          %v204 = vunpack.c.l.bf16 %v200
          %v205 = vunpack.c.l.bf16 %v201
          %v206 = vunpack.c.l.bf16 %v202
          %v207 = vunpack.c.l.bf16 %v203
          %v212 = vcombine.low %v204, %v205
          %v213 = vcombine.low %v206, %v207
          %v216 = vsub.f32 %v180, %v212
          %v217 = vsub.f32 %v181, %v213
          %v220 = vcombine.high %v216, %v216
          %v221 = vcombine.high %v217, %v217
          %v224 = vpack.c.bf16 %v216, %v216
          %v225 = vpack.c.bf16 %v220, %v220
          %v226 = vpack.c.bf16 %v217, %v217
          %v227 = vpack.c.bf16 %v221, %v221
          %v228 = vld [vmem:[#allocation2] sm:$0xf]
          %v229 = vld [vmem:[#allocation2 + $0x4] sm:$0xf]
          %230 = vmatprep.subr.bf16.mxu0 %v225
          %231 = vmatpush1.bf16.xpose.msra.mxu0 %v224
          %232 = vmatprep.subr.bf16.mxu0 0
          %233 = vmatpush1.bf16.xpose.msra.mxu0 0
          %234 = vmatprep.subr.bf16.mxu0 0
          %235 = vmatpush1.bf16.xpose.msra.mxu0 0
          %236 = vmatprep.subr.bf16.mxu0 0
          %237 = vmatpush1.bf16.xpose.msra.mxu0 0
          %238 = vmatprep.subr.bf16.mxu0 0
          %239 = vmatpush1.bf16.xpose.msra.mxu0 0
          %240 = vmatprep.subr.bf16.mxu0 0
          %241 = vmatpush1.bf16.xpose.msra.mxu0 0
          %242 = vmatprep.subr.bf16.mxu0 0
          %243 = vmatpush1.bf16.xpose.msra.mxu0 0
          %244 = vmatprep.subr.bf16.mxu0 0
          %245 = vmatpush1.bf16.xpose.msra.mxu0 0
          %246 = vmatprep.subr.bf16.mxu0 0
          %247 = vmatpush1.bf16.xpose.msra.mxu0 0
          %248 = vmatprep.subr.bf16.mxu0 0
          %249 = vmatpush1.bf16.xpose.msra.mxu0 0
          %250 = vmatprep.subr.bf16.mxu0 0
          %251 = vmatpush1.bf16.xpose.msra.mxu0 0
          %252 = vmatprep.subr.bf16.mxu0 0
          %253 = vmatpush1.bf16.xpose.msra.mxu0 0
          %254 = vmatprep.subr.bf16.mxu0 0
          %255 = vmatpush1.bf16.xpose.msra.mxu0 0
          %256 = vmatprep.subr.bf16.mxu0 0
          %257 = vmatpush1.bf16.xpose.msra.mxu0 0
          %258 = vmatprep.subr.bf16.mxu0 0
          %259 = vmatpush1.bf16.xpose.msra.mxu0 0
          %260 = vmatprep.subr.bf16.mxu0 0
          %261 = vmatpush1.bf16.xpose.msra.mxu0 0
          %262 = vmatprep.mubr.bf16.mxu0 %v201
          %263 = vmatmul.mubr.bf16.gmra.mrb[0].mxu0 %v200
          %v264 = vpop.f32.mrb[0].mxu0
          %v265 = vadd.f32 0.0, %v264
          %v266 = vpop.f32.mrb[0].mxu0
          %v267 = vpop.f32.mrb[0].mxu0
          %v268 = vpop.f32.mrb[0].mxu0
          %269 = vdwg.mxu0
          %270 = vmatprep.subr.bf16.mxu0 %v227
          %271 = vmatpush1.bf16.xpose.msra.mxu0 %v226
          %272 = vmatprep.subr.bf16.mxu0 0
          %273 = vmatpush1.bf16.xpose.msra.mxu0 0
          %274 = vmatprep.subr.bf16.mxu0 0
          %275 = vmatpush1.bf16.xpose.msra.mxu0 0
          %276 = vmatprep.subr.bf16.mxu0 0
          %277 = vmatpush1.bf16.xpose.msra.mxu0 0
          %278 = vmatprep.subr.bf16.mxu0 0
          %279 = vmatpush1.bf16.xpose.msra.mxu0 0
          %280 = vmatprep.subr.bf16.mxu0 0
          %281 = vmatpush1.bf16.xpose.msra.mxu0 0
          %282 = vmatprep.subr.bf16.mxu0 0
          %283 = vmatpush1.bf16.xpose.msra.mxu0 0
          %284 = vmatprep.subr.bf16.mxu0 0
          %285 = vmatpush1.bf16.xpose.msra.mxu0 0
          %286 = vmatprep.subr.bf16.mxu0 0
          %287 = vmatpush1.bf16.xpose.msra.mxu0 0
          %288 = vmatprep.subr.bf16.mxu0 0
          %289 = vmatpush1.bf16.xpose.msra.mxu0 0
          %290 = vmatprep.subr.bf16.mxu0 0
          %291 = vmatpush1.bf16.xpose.msra.mxu0 0
          %292 = vmatprep.subr.bf16.mxu0 0
          %293 = vmatpush1.bf16.xpose.msra.mxu0 0
          %294 = vmatprep.subr.bf16.mxu0 0
          %295 = vmatpush1.bf16.xpose.msra.mxu0 0
          %296 = vmatprep.subr.bf16.mxu0 0
          %297 = vmatpush1.bf16.xpose.msra.mxu0 0
          %298 = vmatprep.subr.bf16.mxu0 0
          %299 = vmatpush1.bf16.xpose.msra.mxu0 0
          %300 = vmatprep.subr.bf16.mxu0 0
          %301 = vmatpush1.bf16.xpose.msra.mxu0 0
          %302 = vmatprep.mubr.bf16.mxu0 %v203
          %303 = vmatmul.mubr.bf16.gmra.mrb[0].mxu0 %v202
          %v304 = vpop.f32.mrb[0].mxu0
          %v305 = vadd.f32 0.0, %v304
          %v306 = vpop.f32.mrb[0].mxu0
          %v307 = vpop.f32.mrb[0].mxu0
          %v308 = vpop.f32.mrb[0].mxu0
          %309 = vdwg.mxu0
          %310 = vmatprep.subr.bf16.mxu0 %v201
          %311 = vmatpush1.bf16.xpose.msra.mxu0 %v200
          %312 = vmatprep.subr.bf16.mxu0 0
          %313 = vmatpush1.bf16.xpose.msra.mxu0 0
          %314 = vmatprep.subr.bf16.mxu0 0
          %315 = vmatpush1.bf16.xpose.msra.mxu0 0
          %316 = vmatprep.subr.bf16.mxu0 0
          %317 = vmatpush1.bf16.xpose.msra.mxu0 0
          %318 = vmatprep.subr.bf16.mxu0 0
          %319 = vmatpush1.bf16.xpose.msra.mxu0 0
          %320 = vmatprep.subr.bf16.mxu0 0
          %321 = vmatpush1.bf16.xpose.msra.mxu0 0
          %322 = vmatprep.subr.bf16.mxu0 0
          %323 = vmatpush1.bf16.xpose.msra.mxu0 0
          %324 = vmatprep.subr.bf16.mxu0 0
          %325 = vmatpush1.bf16.xpose.msra.mxu0 0
          %326 = vmatprep.subr.bf16.mxu0 0
          %327 = vmatpush1.bf16.xpose.msra.mxu0 0
          %328 = vmatprep.subr.bf16.mxu0 0
          %329 = vmatpush1.bf16.xpose.msra.mxu0 0
          %330 = vmatprep.subr.bf16.mxu0 0
          %331 = vmatpush1.bf16.xpose.msra.mxu0 0
          %332 = vmatprep.subr.bf16.mxu0 0
          %333 = vmatpush1.bf16.xpose.msra.mxu0 0
          %334 = vmatprep.subr.bf16.mxu0 0
          %335 = vmatpush1.bf16.xpose.msra.mxu0 0
          %336 = vmatprep.subr.bf16.mxu0 0
          %337 = vmatpush1.bf16.xpose.msra.mxu0 0
          %338 = vmatprep.subr.bf16.mxu0 0
          %339 = vmatpush1.bf16.xpose.msra.mxu0 0
          %340 = vmatprep.subr.bf16.mxu0 0
          %341 = vmatpush1.bf16.xpose.msra.mxu0 0
          %342 = vmatprep.mubr.bf16.mxu0 %v201
          %343 = vmatmul.mubr.bf16.gmra.mrb[0].mxu0 %v200
          %v344 = vpop.f32.mrb[0].mxu0
          %v345 = vadd.f32 %v265, %v344
          %v346 = vpop.f32.mrb[0].mxu0
          %v347 = vpop.f32.mrb[0].mxu0
          %v348 = vpop.f32.mrb[0].mxu0
          %349 = vdwg.mxu0
          %350 = vmatprep.subr.bf16.mxu0 %v203
          %351 = vmatpush1.bf16.xpose.msra.mxu0 %v202
          %352 = vmatprep.subr.bf16.mxu0 0
          %353 = vmatpush1.bf16.xpose.msra.mxu0 0
          %354 = vmatprep.subr.bf16.mxu0 0
          %355 = vmatpush1.bf16.xpose.msra.mxu0 0
          %356 = vmatprep.subr.bf16.mxu0 0
          %357 = vmatpush1.bf16.xpose.msra.mxu0 0
          %358 = vmatprep.subr.bf16.mxu0 0
          %359 = vmatpush1.bf16.xpose.msra.mxu0 0
          %360 = vmatprep.subr.bf16.mxu0 0
          %361 = vmatpush1.bf16.xpose.msra.mxu0 0
          %362 = vmatprep.subr.bf16.mxu0 0
          %363 = vmatpush1.bf16.xpose.msra.mxu0 0
          %364 = vmatprep.subr.bf16.mxu0 0
          %365 = vmatpush1.bf16.xpose.msra.mxu0 0
          %366 = vmatprep.subr.bf16.mxu0 0
          %367 = vmatpush1.bf16.xpose.msra.mxu0 0
          %368 = vmatprep.subr.bf16.mxu0 0
          %369 = vmatpush1.bf16.xpose.msra.mxu0 0
          %370 = vmatprep.subr.bf16.mxu0 0
          %371 = vmatpush1.bf16.xpose.msra.mxu0 0
          %372 = vmatprep.subr.bf16.mxu0 0
          %373 = vmatpush1.bf16.xpose.msra.mxu0 0
          %374 = vmatprep.subr.bf16.mxu0 0
          %375 = vmatpush1.bf16.xpose.msra.mxu0 0
          %376 = vmatprep.subr.bf16.mxu0 0
          %377 = vmatpush1.bf16.xpose.msra.mxu0 0
          %378 = vmatprep.subr.bf16.mxu0 0
          %379 = vmatpush1.bf16.xpose.msra.mxu0 0
          %380 = vmatprep.subr.bf16.mxu0 0
          %381 = vmatpush1.bf16.xpose.msra.mxu0 0
          %382 = vmatprep.mubr.bf16.mxu0 %v203
          %383 = vmatmul.mubr.bf16.gmra.mrb[0].mxu0 %v202
          %v384 = vpop.f32.mrb[0].mxu0
          %v385 = vadd.f32 %v305, %v384
          %v386 = vpop.f32.mrb[0].mxu0
          %v387 = vpop.f32.mrb[0].mxu0
          %v388 = vpop.f32.mrb[0].mxu0
          %389 = vdwg.mxu0
          %390 = vmatprep.subr.bf16.mxu0 %v201
          %391 = vmatpush1.bf16.xpose.msra.mxu0 %v200
          %392 = vmatprep.subr.bf16.mxu0 0
          %393 = vmatpush1.bf16.xpose.msra.mxu0 0
          %394 = vmatprep.subr.bf16.mxu0 0
          %395 = vmatpush1.bf16.xpose.msra.mxu0 0
          %396 = vmatprep.subr.bf16.mxu0 0
          %397 = vmatpush1.bf16.xpose.msra.mxu0 0
          %398 = vmatprep.subr.bf16.mxu0 0
          %399 = vmatpush1.bf16.xpose.msra.mxu0 0
          %400 = vmatprep.subr.bf16.mxu0 0
          %401 = vmatpush1.bf16.xpose.msra.mxu0 0
          %402 = vmatprep.subr.bf16.mxu0 0
          %403 = vmatpush1.bf16.xpose.msra.mxu0 0
          %404 = vmatprep.subr.bf16.mxu0 0
          %405 = vmatpush1.bf16.xpose.msra.mxu0 0
          %406 = vmatprep.subr.bf16.mxu0 0
          %407 = vmatpush1.bf16.xpose.msra.mxu0 0
          %408 = vmatprep.subr.bf16.mxu0 0
          %409 = vmatpush1.bf16.xpose.msra.mxu0 0
          %410 = vmatprep.subr.bf16.mxu0 0
          %411 = vmatpush1.bf16.xpose.msra.mxu0 0
          %412 = vmatprep.subr.bf16.mxu0 0
          %413 = vmatpush1.bf16.xpose.msra.mxu0 0
          %414 = vmatprep.subr.bf16.mxu0 0
          %415 = vmatpush1.bf16.xpose.msra.mxu0 0
          %416 = vmatprep.subr.bf16.mxu0 0
          %417 = vmatpush1.bf16.xpose.msra.mxu0 0
          %418 = vmatprep.subr.bf16.mxu0 0
          %419 = vmatpush1.bf16.xpose.msra.mxu0 0
          %420 = vmatprep.subr.bf16.mxu0 0
          %421 = vmatpush1.bf16.xpose.msra.mxu0 0
          %422 = vmatprep.mubr.bf16.mxu0 %v225
          %423 = vmatmul.mubr.bf16.gmra.mrb[0].mxu0 %v224
          %v424 = vpop.f32.mrb[0].mxu0
          %v425 = vadd.f32 0.0, %v424
          %v426 = vpop.f32.mrb[0].mxu0
          %v427 = vpop.f32.mrb[0].mxu0
          %v428 = vpop.f32.mrb[0].mxu0
          %429 = vdwg.mxu0
          %430 = vmatprep.subr.bf16.mxu0 %v203
          %431 = vmatpush1.bf16.xpose.msra.mxu0 %v202
          %432 = vmatprep.subr.bf16.mxu0 0
          %433 = vmatpush1.bf16.xpose.msra.mxu0 0
          %434 = vmatprep.subr.bf16.mxu0 0
          %435 = vmatpush1.bf16.xpose.msra.mxu0 0
          %436 = vmatprep.subr.bf16.mxu0 0
          %437 = vmatpush1.bf16.xpose.msra.mxu0 0
          %438 = vmatprep.subr.bf16.mxu0 0
          %439 = vmatpush1.bf16.xpose.msra.mxu0 0
          %440 = vmatprep.subr.bf16.mxu0 0
          %441 = vmatpush1.bf16.xpose.msra.mxu0 0
          %442 = vmatprep.subr.bf16.mxu0 0
          %443 = vmatpush1.bf16.xpose.msra.mxu0 0
          %444 = vmatprep.subr.bf16.mxu0 0
          %445 = vmatpush1.bf16.xpose.msra.mxu0 0
          %446 = vmatprep.subr.bf16.mxu0 0
          %447 = vmatpush1.bf16.xpose.msra.mxu0 0
          %448 = vmatprep.subr.bf16.mxu0 0
          %449 = vmatpush1.bf16.xpose.msra.mxu0 0
          %450 = vmatprep.subr.bf16.mxu0 0
          %451 = vmatpush1.bf16.xpose.msra.mxu0 0
          %452 = vmatprep.subr.bf16.mxu0 0
          %453 = vmatpush1.bf16.xpose.msra.mxu0 0
          %454 = vmatprep.subr.bf16.mxu0 0
          %455 = vmatpush1.bf16.xpose.msra.mxu0 0
          %456 = vmatprep.subr.bf16.mxu0 0
          %457 = vmatpush1.bf16.xpose.msra.mxu0 0
          %458 = vmatprep.subr.bf16.mxu0 0
          %459 = vmatpush1.bf16.xpose.msra.mxu0 0
          %460 = vmatprep.subr.bf16.mxu0 0
          %461 = vmatpush1.bf16.xpose.msra.mxu0 0
          %462 = vmatprep.mubr.bf16.mxu0 %v227
          %463 = vmatmul.mubr.bf16.gmra.mrb[0].mxu0 %v226
          %v464 = vpop.f32.mrb[0].mxu0
          %v465 = vadd.f32 0.0, %v464
          %v466 = vpop.f32.mrb[0].mxu0
          %v467 = vpop.f32.mrb[0].mxu0
          %v468 = vpop.f32.mrb[0].mxu0
          %469 = vdwg.mxu0
          %v470 = vadd.f32 %v345, %v425
          %v471 = vadd.f32 %v385, %v465
          %v472 = vadd.f32 %v228, %v470
          %v473 = vadd.f32 %v229, %v471
          %vm474 = vcmask 27648
          %475 = vst.msk [vmem:[#allocation2] sm:$0xf] %vm474, %v472
          %476 = vst.msk [vmem:[#allocation2 + $0x4] sm:$0xf] %vm474, %v473
        $region40: #{tpu_custom_call.1} parent=27 // pred_fallthru
          _
        // Predicated region
        $region41: #{tpu_custom_call.1} parent=27 // pred_check
          _
        $region42: #{tpu_custom_call.1} parent=27 // pred_check_branch
          %478 = sbr.rel (%p184) target = $region44
        $region43: #{tpu_custom_call.1} parent=27 // pred_region
          %v479 = vld [vmem:[#allocation2] sm:$0xf]
          %v480 = vld [vmem:[#allocation2 + $0x4] sm:$0xf]
          %vm481 = vcmask 27648
          %v482 = vsel %vm481, %v479, inf
          %483 = vmin.xlane.f32.xlu0 %v482
          %v484 = vpop.xlane.xlu0 %483
          %v485 = vsel %vm481, %v480, inf
          %486 = vmin.xlane.f32.xlu0 %v485
          %v487 = vpop.xlane.xlu0 %486
          %v488 = vsub.f32 %v484, %v479
          %v489 = vsub.f32 %v487, %v480
          %v490 = vmul.f32 %v488, 1.442695
          %v491 = vpow.pop %v490
          %v492 = vmul.f32 %v489, 1.442695
          %v493 = vpow.pop %v492
          %v494 = vsel %vm481, %v491, 0.0
          %495 = vadd.xlane.f32.xlu0 %v494
          %v496 = vpop.xlane.xlu0 %495
          %v497 = vsel %vm481, %v493, 0.0
          %498 = vadd.xlane.f32.xlu0 %v497
          %v499 = vpop.xlane.xlu0 %498
          %v500 = vrcp.pop %v496
          %v501 = vrcp.pop %v499
          %v502 = vmul.f32 %v491, %v500
          %v503 = vmul.f32 %v493, %v501
          %504 = vst.msk [vmem:[#allocation2] sm:$0xf] %vm481, %v502
          %505 = vst.msk [vmem:[#allocation2 + $0x4] sm:$0xf] %vm481, %v503
        $region44: #{tpu_custom_call.1} parent=27 // pred_fallthru
          _
        %p506 = scmp.eq.s32.totalorder %s24, 1
        // Predicated region
        $region45: #{tpu_custom_call.1} parent=27 // pred_check
          %p507 = pneg %p506
        $region46: #{tpu_custom_call.1} parent=27 // pred_check_branch
          %509 = sbr.rel (%p507) target = $region48
        $region47: #{tpu_custom_call.1} parent=27 // pred_region
          %v510 = vld [vmem:[#allocation2] sm:$0xf]
          %v511 = vld [vmem:[#allocation2 + $0x4] sm:$0xf]
          %v512 = vpack.c.bf16 %v510, %v510
          %v513 = vpack.c.bf16 %v511, %v511
          %v516 = vcombine.high %v180, %v180
          %v517 = vcombine.high %v181, %v181
          %v520 = vpack.c.bf16 %v180, %v180
          %v521 = vpack.c.bf16 %v516, %v516
          %v522 = vpack.c.bf16 %v181, %v181
          %v523 = vpack.c.bf16 %v517, %v517
          %vm524 = vcmask 31744
          %v526 = vsel %vm524, %v512, 0
          %vm528 = vcmask 1041408
          %v530 = vsel %vm528, %v520, 0
          %v533 = vsel %vm528, %v521, 0
          %535 = vmatprep.subr.bf16.mxu0 %v533
          %536 = vmatpush1.bf16.msra.mxu0 %v530
          %537 = vmatprep.subr.bf16.mxu0 0
          %538 = vmatpush1.bf16.msra.mxu0 0
          %539 = vmatprep.subr.bf16.mxu0 0
          %540 = vmatpush1.bf16.msra.mxu0 0
          %541 = vmatprep.subr.bf16.mxu0 0
          %542 = vmatpush1.bf16.msra.mxu0 0
          %543 = vmatprep.subr.bf16.mxu0 0
          %544 = vmatpush1.bf16.msra.mxu0 0
          %545 = vmatprep.subr.bf16.mxu0 0
          %546 = vmatpush1.bf16.msra.mxu0 0
          %547 = vmatprep.subr.bf16.mxu0 0
          %548 = vmatpush1.bf16.msra.mxu0 0
          %549 = vmatprep.subr.bf16.mxu0 0
          %550 = vmatpush1.bf16.msra.mxu0 0
          %551 = vmatprep.subr.bf16.mxu0 0
          %552 = vmatpush1.bf16.msra.mxu0 0
          %553 = vmatprep.subr.bf16.mxu0 0
          %554 = vmatpush1.bf16.msra.mxu0 0
          %555 = vmatprep.subr.bf16.mxu0 0
          %556 = vmatpush1.bf16.msra.mxu0 0
          %557 = vmatprep.subr.bf16.mxu0 0
          %558 = vmatpush1.bf16.msra.mxu0 0
          %559 = vmatprep.subr.bf16.mxu0 0
          %560 = vmatpush1.bf16.msra.mxu0 0
          %561 = vmatprep.subr.bf16.mxu0 0
          %562 = vmatpush1.bf16.msra.mxu0 0
          %563 = vmatprep.subr.bf16.mxu0 0
          %564 = vmatpush1.bf16.msra.mxu0 0
          %565 = vmatprep.subr.bf16.mxu0 0
          %566 = vmatpush1.bf16.msra.mxu0 0
          %567 = vmatprep.mubr.bf16.mxu0 0
          %568 = vmatmul.mubr.bf16.gmra.mrb[0].mxu0 %v526
          %v569 = vpop.f32.mrb[0].mxu0
          %v570 = vadd.f32 0.0, %v569
          %v571 = vpop.f32.mrb[0].mxu0
          %v572 = vadd.f32 0.0, %v571
          %v573 = vpop.f32.mrb[0].mxu0
          %v574 = vpop.f32.mrb[0].mxu0
          %575 = vdwg.mxu0
          %v577 = vsel %vm524, %v513, 0
          %v580 = vsel %vm528, %v522, 0
          %v583 = vsel %vm528, %v523, 0
          %585 = vmatprep.subr.bf16.mxu0 %v583
          %586 = vmatpush1.bf16.msra.mxu0 %v580
          %587 = vmatprep.subr.bf16.mxu0 0
          %588 = vmatpush1.bf16.msra.mxu0 0
          %589 = vmatprep.subr.bf16.mxu0 0
          %590 = vmatpush1.bf16.msra.mxu0 0
          %591 = vmatprep.subr.bf16.mxu0 0
          %592 = vmatpush1.bf16.msra.mxu0 0
          %593 = vmatprep.subr.bf16.mxu0 0
          %594 = vmatpush1.bf16.msra.mxu0 0
          %595 = vmatprep.subr.bf16.mxu0 0
          %596 = vmatpush1.bf16.msra.mxu0 0
          %597 = vmatprep.subr.bf16.mxu0 0
          %598 = vmatpush1.bf16.msra.mxu0 0
          %599 = vmatprep.subr.bf16.mxu0 0
          %600 = vmatpush1.bf16.msra.mxu0 0
          %601 = vmatprep.subr.bf16.mxu0 0
          %602 = vmatpush1.bf16.msra.mxu0 0
          %603 = vmatprep.subr.bf16.mxu0 0
          %604 = vmatpush1.bf16.msra.mxu0 0
          %605 = vmatprep.subr.bf16.mxu0 0
          %606 = vmatpush1.bf16.msra.mxu0 0
          %607 = vmatprep.subr.bf16.mxu0 0
          %608 = vmatpush1.bf16.msra.mxu0 0
          %609 = vmatprep.subr.bf16.mxu0 0
          %610 = vmatpush1.bf16.msra.mxu0 0
          %611 = vmatprep.subr.bf16.mxu0 0
          %612 = vmatpush1.bf16.msra.mxu0 0
          %613 = vmatprep.subr.bf16.mxu0 0
          %614 = vmatpush1.bf16.msra.mxu0 0
          %615 = vmatprep.subr.bf16.mxu0 0
          %616 = vmatpush1.bf16.msra.mxu0 0
          %617 = vmatprep.mubr.bf16.mxu0 0
          %618 = vmatmul.mubr.bf16.gmra.mrb[0].mxu0 %v577
          %v619 = vpop.f32.mrb[0].mxu0
          %v620 = vadd.f32 0.0, %v619
          %v621 = vpop.f32.mrb[0].mxu0
          %v622 = vadd.f32 0.0, %v621
          %v623 = vpop.f32.mrb[0].mxu0
          %v624 = vpop.f32.mrb[0].mxu0
          %625 = vdwg.mxu0
          %s626 = sld [smem:[#allocation3]]
          %v627 = vstv %s626
          %v628 = vmul.f32 %v627, %v570
          %v629 = vmul.f32 %v627, %v572
          %v630 = vmul.f32 %v627, %v620
          %v631 = vmul.f32 %v627, %v622
          %v632 = vadd.f32 %v628, %v180
          %v633 = vadd.f32 %v629, %v516
          %v634 = vadd.f32 %v630, %v181
          %v635 = vadd.f32 %v631, %v517
          %v640 = vcombine.low %v632, %v633
          %v641 = vcombine.low %v634, %v635
          %644 = vst [vmem:[%s173] sm:$0xff] %v640
          %645 = vst [vmem:[%s173 + $0x8] sm:$0xff] %v641
        $region48: #{tpu_custom_call.1} parent=27 // pred_fallthru
          _
        %s646 = sand.u32 %s98, 1
        %s647 = scalar_lea.sflag [#allocation6], %s646
        %s648 = sand.u32 %s98, 1
        %s649 = smul.addr %s648, 16
        %s650 = scalar_lea.vmem [#allocation7], %s649
        // Predicated region
        $region49: #{tpu_custom_call.1} parent=27 // pred_check
          %p651 = pneg %p108
        $region50: #{tpu_custom_call.1} parent=27 // pred_check_branch
          %653 = sbr.rel (%p651) target = $region52
        $region51: #{tpu_custom_call.1} parent=27 // pred_region
          %s654 = smul.u32 %s24, %s25
          %s655 = smul.u32 2, %s23
          %s656 = smul.u32 2, %s654
          %s658 = ssub.s32 256, 256
          %659 = vsyncadd %s647, %s658
          %s660 = smul.addr %s655, 2
          %s661 = sadd.s32 %s656, %s660
          %s662 = smul.addr %s661, 64
          %s663 = scalar_lea.hbm %s2, %s662
          %s664 = sshll.u32 %s650, 4
          %s665 = int_to_ptr.vmem [resolvable:$true] %s664
          %670 = dma.vmem_to_hbm [thread:$0]  %s665, 256, %s663, %s647, 128, 128, 8
        $region52: #{tpu_custom_call.1} parent=27 // pred_fallthru
          _
      $region28: #{tpu_custom_call.1} parent=5 // pred_fallthru
        _
      %p671 = scmp.le.s32.totalorder 2, %s13
      // Predicated region
      $region53: #{tpu_custom_call.1} parent=5 // pred_check
        %p672 = pneg %p671
      $region54: #{tpu_custom_call.1} parent=5 // pred_check_branch
        %674 = sbr.rel (%p672) target = $region56
      $region55: #{tpu_custom_call.1} parent=5 // pred_region
        %s675 = ssub.s32 %s13, 2
        // Predicated region
        $region57: #{tpu_custom_call.1} parent=55 // pred_check
          %p676 = pneg %p114
        $region58: #{tpu_custom_call.1} parent=55 // pred_check_branch
          %678 = sbr.rel (%p676) target = $region60
        $region59: #{tpu_custom_call.1} parent=55 // pred_region
          %s679 = sand.u32 %s99, 1
          %s680 = scalar_lea.sflag [#allocation6], %s679
          %s681 = sand.u32 %s99, 1
          %s682 = smul.addr %s681, 16
          %s683 = scalar_lea.vmem [#allocation7], %s682
          %684 = dma.done %s680, 256
        $region60: #{tpu_custom_call.1} parent=55 // pred_fallthru
          _
      $region56: #{tpu_custom_call.1} parent=5 // pred_fallthru
        _
    $region6: #{tpu_custom_call.1} parent=1 // loop_footer
      %s17 = sadd.s32 1, %s13
    $region7: #{tpu_custom_call.1} parent=1 // loop_footer_branch
      %12 = sbr.rel target = $region3
    $region8: #{tpu_custom_call.1} parent=1 // loop_exit
      _
    %685 = vsyncpa [#allocation5], 1
    %s686 = scalar_lea.sflag [#allocation5], 1
    %687 = vsyncpa %s686, 1
    %688 = vsyncpa [#allocation6], 1
    %s689 = scalar_lea.sflag [#allocation6], 1
    %690 = vsyncpa %s689, 1

</llo_original>
